<compile_context>
chip_gen: v7x
topology: tpu7x:2x2x1
jax: 0.10.0
libtpu: 0.0.40
codegen_flags: <defaults>
</compile_context>

<pallas_src>
import functools

import jax
import jax.numpy as jnp
from jax import lax
from jax.experimental import pallas as pl
from jax.experimental.pallas import tpu as pltpu


def _round_up(x, m):
    return ((x + m - 1) // m) * m


def _ood2_kernel(z_ref, wpt_ref, b_ref, wot_ref, o_ref, *,
                 inv_temp, do_norm, use_bf16):
    in_dt = jnp.bfloat16 if use_bf16 else jnp.float32

    # fc_pre: (tile_b, Din) @ (Din, H) + bias, then ReLU (f32 accumulation).
    h = jnp.dot(z_ref[...].astype(in_dt), wpt_ref[...].astype(in_dt),
                preferred_element_type=jnp.float32)
    h = jnp.maximum(h + b_ref[...].astype(jnp.float32), 0.0)

    if do_norm:
        # torch F.normalize(h, p=2, dim=1, eps=1e-12) fused with the 1/temp
        # division:  s = inv_temp / max(||h||, 1e-12)
        #              = inv_temp * rsqrt(max(sum(h*h), 1e-24))
        sq = jnp.sum(h * h, axis=-1, keepdims=True)
        scale = inv_temp * lax.rsqrt(jnp.maximum(sq, 1e-24))
        h = h * scale

    # fc_ood: (tile_b, H) @ (H, OUT_pad)   -- OUT_pad is a multiple of 128 so
    # the store below is a dense (unmasked) vst.
    out = jnp.dot(h.astype(in_dt), wot_ref[...].astype(in_dt),
                  preferred_element_type=jnp.float32)
    o_ref[...] = out.astype(o_ref.dtype)


def ood_heads2_forward(z, w_pre, b_pre, w_ood, *, temp=0.05, norm=True,
                       tile_b=512, use_bf16=False):
    """Fused OOD_heads2 forward.

    z:     [B, Din]   input activations
    w_pre: [H, Din]   fc_pre.weight (PyTorch layout), H == 2048 in the module
    b_pre: [H]        fc_pre.bias
    w_ood: [OUT, H]   fc_ood.weight (no bias), OUT == num_classes * 2
    """
    B, Din = z.shape
    H, din_w = w_pre.shape
    assert din_w == Din
    assert b_pre.shape == (H,)
    OUT, h_w = w_ood.shape
    assert h_w == H

    # --- batch tiling: tile_b is a sublane multiple; pad B up to a multiple ---
    tile_b = max(8, min(int(tile_b), _round_up(B, 8)))
    tile_b = _round_up(tile_b, 8)
    num_tiles = pl.cdiv(B, tile_b)
    b_pad = num_tiles * tile_b
    if b_pad != B:
        z = jnp.pad(z, ((0, b_pad - B), (0, 0)))

    # --- lane-dense output: pad OUT up to a multiple of 128 ---
    out_pad = _round_up(max(OUT, 128), 128)
    w_ood_p = w_ood if out_pad == OUT else jnp.pad(
        w_ood, ((0, out_pad - OUT), (0, 0)))

    # Row-major operands for the MXU.
    wpt = w_pre.T            # [Din, H]
    wot = w_ood_p.T          # [H, OUT_pad]
    b2d = b_pre.reshape(1, H)

    inv_temp = (1.0 / float(temp)) if norm else 1.0
    kernel = functools.partial(_ood2_kernel, inv_temp=inv_temp,
                               do_norm=bool(norm), use_bf16=bool(use_bf16))

    # Conservative VMEM footprint (double-buffered tiles; weights have a
    # constant index_map so they are only DMA'd once, but count both buffers).
    # TODO(synk): pl.Buffered(1) on the weight specs would return ~half their
    # VMEM once buffer_count=1 pipelining is guaranteed on all targets.
    vmem_bytes = 4 * (2 * tile_b * Din + 2 * Din * H + 2 * H
                      + 2 * H * out_pad + 2 * tile_b * out_pad + tile_b * H)
    vmem_limit = int(min(max(2 * vmem_bytes, 32 << 20), 100 << 20))

    cost = pl.CostEstimate(
        flops=2 * b_pad * (Din * H + H * out_pad),
        transcendentals=b_pad if norm else 0,
        bytes_accessed=4 * (b_pad * Din + Din * H + H
                            + H * out_pad + b_pad * out_pad),
    )

    out_padded = pl.pallas_call(
        kernel,
        out_shape=jax.ShapeDtypeStruct((b_pad, out_pad), z.dtype),
        grid_spec=pltpu.PrefetchScalarGridSpec(
            num_scalar_prefetch=0,
            grid=(num_tiles,),
            in_specs=[
                pl.BlockSpec((tile_b, Din), lambda i: (i, 0)),   # z tile
                pl.BlockSpec((Din, H), lambda i: (0, 0)),        # fc_pre.weight^T
                pl.BlockSpec((1, H), lambda i: (0, 0)),          # fc_pre.bias
                pl.BlockSpec((H, out_pad), lambda i: (0, 0)),    # fc_ood.weight^T (lane-padded)
            ],
            out_specs=pl.BlockSpec((tile_b, out_pad), lambda i: (i, 0)),
        ),
        compiler_params=pltpu.CompilerParams(
            dimension_semantics=("parallel",),
            vmem_limit_bytes=vmem_limit,
        ),
        cost_estimate=cost,
    )(z, wpt, b2d, wot)

    return out_padded[:B, :OUT]


def _reference(z, w_pre, b_pre, w_ood, temp=0.05, norm=True):
    h = jnp.maximum(z @ w_pre.T + b_pre, 0.0)
    if norm:
        nrm = jnp.maximum(jnp.linalg.norm(h, axis=1, keepdims=True), 1e-12)
        h = h / nrm
        return (h @ w_ood.T) / temp
    return h @ w_ood.T


if __name__ == "__main__":
    key = jax.random.PRNGKey(0)
    k_z, k_wp, k_bp, k_wo = jax.random.split(key, 4)

    B = 20            # deliberately NOT a multiple of tile_b -> exercises padding
    D_IN = 128        # small stand-in for input_size=2048
    HID = 128         # small stand-in for the hard-coded 2048 of fc_pre
    NUM_CLASSES = 4   # small stand-in for 12
    OUT = NUM_CLASSES * 2

    z = jax.random.normal(k_z, (B, D_IN), dtype=jnp.float32)
    w_pre = 0.1 * jax.random.normal(k_wp, (HID, D_IN), dtype=jnp.float32)
    b_pre = 0.1 * jax.random.normal(k_bp, (HID,), dtype=jnp.float32)
    w_ood = 0.1 * jax.random.normal(k_wo, (OUT, HID), dtype=jnp.float32)

    # Small tile_b to exercise a multi-step grid + padded final tile.
    out = ood_heads2_forward(z, w_pre, b_pre, w_ood, temp=0.05, norm=True,
                             tile_b=8)
    out = jax.block_until_ready(out)
    ref = _reference(z, w_pre, b_pre, w_ood, temp=0.05, norm=True)
    assert out.shape == (B, OUT)
    assert jnp.allclose(out, ref, atol=1e-3, rtol=1e-3), \
        float(jnp.max(jnp.abs(out - ref)))

    # norm=False branch (no normalize, no temp division).
    out2 = jax.block_until_ready(
        ood_heads2_forward(z, w_pre, b_pre, w_ood, temp=0.05, norm=False,
                           tile_b=16))
    ref2 = _reference(z, w_pre, b_pre, w_ood, temp=0.05, norm=False)
    assert jnp.allclose(out2, ref2, atol=1e-3, rtol=1e-3)

    print("KERNEL_OK")
</pallas_src>

<mosaic_0001>
module attributes {stable_mosaic.version = 11 : i64} {
  func.func @_ood2_kernel(%arg0: i32, %arg1: memref<8x128xf32, #tpu.memory_space<vmem>>, %arg2: memref<128x128xf32, #tpu.memory_space<vmem>>, %arg3: memref<1x128xf32, #tpu.memory_space<vmem>>, %arg4: memref<128x128xf32, #tpu.memory_space<vmem>>, %arg5: memref<8x128xf32, #tpu.memory_space<vmem>>) attributes {dimension_semantics = [#tpu.dimension_semantics<parallel>], iteration_bounds = array<i64: 3>, scalar_prefetch = 0 : i64, scratch_operands = 0 : i64, tpu.core_type = #tpu.core_type<tc>, window_params = [{transform_indices = @transform_0, window_bounds = array<i64: 8, 128>}, {pipeline_mode = #tpu.pipeline_mode<synchronous>, transform_indices = @transform_1, window_bounds = array<i64: 128, 128>}, {pipeline_mode = #tpu.pipeline_mode<synchronous>, transform_indices = @transform_2, window_bounds = array<i64: 1, 128>}, {pipeline_mode = #tpu.pipeline_mode<synchronous>, transform_indices = @transform_3, window_bounds = array<i64: 128, 128>}, {transform_indices = @transform_4, window_bounds = array<i64: 8, 128>}]} {
    %c0 = arith.constant 0 : index
    %c0_0 = arith.constant 0 : index
    %0 = vector.load %arg1[%c0, %c0_0] : memref<8x128xf32, #tpu.memory_space<vmem>>, vector<8x128xf32>
    %c0_1 = arith.constant 0 : index
    %c0_2 = arith.constant 0 : index
    %1 = vector.load %arg2[%c0_1, %c0_2] : memref<128x128xf32, #tpu.memory_space<vmem>>, vector<128x128xf32>
    %cst = arith.constant dense<0.000000e+00> : vector<8x128xf32>
    %2 = tpu.matmul %0, %1, %cst {dimension_numbers = #tpu.dot_dimension_numbers<[1], [0], [0], [1], [0, 0, 1, 1], [], []>} : vector<8x128xf32>, vector<128x128xf32>, vector<8x128xf32> -> vector<8x128xf32>
    %c0_3 = arith.constant 0 : index
    %c0_4 = arith.constant 0 : index
    %3 = vector.load %arg3[%c0_3, %c0_4] : memref<1x128xf32, #tpu.memory_space<vmem>>, vector<1x128xf32>
    %4 = vector.broadcast %3 : vector<1x128xf32> to vector<8x128xf32>
    %5 = arith.addf %2, %4 : vector<8x128xf32>
    %cst_5 = arith.constant 0.000000e+00 : f32
    %6 = vector.broadcast %cst_5 : f32 to vector<8x128xf32>
    %7 = arith.maximumf %5, %6 : vector<8x128xf32>
    %8 = arith.mulf %7, %7 : vector<8x128xf32>
    %cst_6 = arith.constant dense<0.000000e+00> : vector<8xf32>
    %9 = vector.multi_reduction <add>, %8, %cst_6 [1] : vector<8x128xf32> to vector<8xf32>
    %10 = vector.shape_cast %9 : vector<8xf32> to vector<8x1xf32>
    %cst_7 = arith.constant 1.000000e-24 : f32
    %11 = vector.broadcast %cst_7 : f32 to vector<8x1xf32>
    %12 = arith.maximumf %10, %11 : vector<8x1xf32>
    %13 = math.rsqrt %12 : vector<8x1xf32>
    %cst_8 = arith.constant 2.000000e+01 : f32
    %14 = vector.broadcast %cst_8 : f32 to vector<8x1xf32>
    %15 = arith.mulf %14, %13 : vector<8x1xf32>
    %16 = vector.broadcast %15 : vector<8x1xf32> to vector<8x128xf32>
    %17 = arith.mulf %7, %16 : vector<8x128xf32>
    %c0_9 = arith.constant 0 : index
    %c0_10 = arith.constant 0 : index
    %18 = vector.load %arg4[%c0_9, %c0_10] : memref<128x128xf32, #tpu.memory_space<vmem>>, vector<128x128xf32>
    %cst_11 = arith.constant dense<0.000000e+00> : vector<8x128xf32>
    %19 = tpu.matmul %17, %18, %cst_11 {dimension_numbers = #tpu.dot_dimension_numbers<[1], [0], [0], [1], [0, 0, 1, 1], [], []>} : vector<8x128xf32>, vector<128x128xf32>, vector<8x128xf32> -> vector<8x128xf32>
    %c0_12 = arith.constant 0 : index
    %c0_13 = arith.constant 0 : index
    %20 = vector.load %arg5[%c0_12, %c0_13] : memref<8x128xf32, #tpu.memory_space<vmem>>, vector<8x128xf32>
    tpu.vector_store %arg5[%c0_12, %c0_13], %19 {strides = array<i32>} : memref<8x128xf32, #tpu.memory_space<vmem>>, vector<8x128xf32>,
    return
  }
  func.func @transform_0(%arg0: i32) -> (i32, i32) {
    %c0_i32 = arith.constant 0 : i32
    %c0_i32_0 = arith.constant 0 : i32
    return %arg0, %c0_i32 : i32, i32
  }
  func.func @transform_1(%arg0: i32) -> (i32, i32) {
    %c0_i32 = arith.constant 0 : i32
    %c0_i32_0 = arith.constant 0 : i32
    %c0_i32_1 = arith.constant 0 : i32
    return %c0_i32, %c0_i32_0 : i32, i32
  }
  func.func @transform_2(%arg0: i32) -> (i32, i32) {
    %c0_i32 = arith.constant 0 : i32
    %c0_i32_0 = arith.constant 0 : i32
    %c0_i32_1 = arith.constant 0 : i32
    return %c0_i32, %c0_i32_0 : i32, i32
  }
  func.func @transform_3(%arg0: i32) -> (i32, i32) {
    %c0_i32 = arith.constant 0 : i32
    %c0_i32_0 = arith.constant 0 : i32
    %c0_i32_1 = arith.constant 0 : i32
    return %c0_i32, %c0_i32_0 : i32, i32
  }
  func.func @transform_4(%arg0: i32) -> (i32, i32) {
    %c0_i32 = arith.constant 0 : i32
    %c0_i32_0 = arith.constant 0 : i32
    return %arg0, %c0_i32 : i32, i32
  }
}

</mosaic_0001>

<llo_original>
// kernel: tpu_custom_call.1
$region0: #{tpu_custom_call.1}
  #allocation0 [shape = 'u32[]', space=smem, size = 0x4, offset = 0x4, fixed_abs, tag = 'smem constant byte address 0x4 - core index']
  #allocation1 [shape = 'u32[144,128]{1,0:T(1,128)}', space=vmem, size = 0x12000, scoped, tag = 'internal scratch']
  %s0 = inlined_call_operand.hbm [shape: f32[24,128], index: 0, kind: input, shape index: {}]
  %s1 = inlined_call_operand.hbm [shape: f32[128,128], index: 1, kind: input, shape index: {}]
  %s2 = inlined_call_operand.vmem [shape: f32[1,128], index: 2, kind: input, shape index: {}]
  %s3 = inlined_call_operand.hbm [shape: f32[128,128], index: 3, kind: input, shape index: {}]
  %s4 = inlined_call_operand.hbm [shape: f32[24,128], index: 4, kind: output, shape index: {}]
  %s5 = sld [smem:[#allocation0]]
  $region61: #{tpu_custom_call.1} parent=0
    _
  %s7 = ssub.s32 1, %s5
  %s8 = scalar_select 0, %s7, %s5
  $region1: #{tpu_custom_call.1} parent=0
    #allocation2 [shape = 'u8[8192]{0}', space=vmem, size = 0x2000, scoped, tag = 'input window, operand 0']
    #allocation3 [shape = 's32[2]{0}', space=sflag, size = 0x8, scoped, tag = 'scoped memory for tpu_custom_call.1']
    #allocation4 [shape = 's32[2]{0}', space=sflag, size = 0x8, scoped, tag = 'scoped memory for tpu_custom_call.1']
    #allocation5 [shape = 'u8[65536]{0}', space=vmem, size = 0x10000, scoped, tag = 'input window, operand 1, single buffered']
    #allocation6 [shape = 's32[1]{0}', space=sflag, size = 0x4, scoped, tag = 'scoped memory for tpu_custom_call.1']
    #allocation7 [shape = 'u8[65536]{0}', space=vmem, size = 0x10000, scoped, tag = 'input window, operand 3, single buffered']
    #allocation8 [shape = 'u8[8192]{0}', space=vmem, size = 0x2000, scoped, tag = 'output window, operand 0']
    %9 = vsyncpa [#allocation3], 0
    %s10 = scalar_lea.sflag [#allocation3], 1
    %11 = vsyncpa %s10, 0
    %12 = vsyncpa [#allocation6], 0
    %13 = vsyncpa [#allocation4], 0
    %s14 = scalar_lea.sflag [#allocation4], 1
    %15 = vsyncpa %s14, 0
    loop: start=0, step=1, limit=5
    $region2: #{tpu_custom_call.1} parent=1 // loop_pre_header
      _
    $region3: #{tpu_custom_call.1} parent=1 // loop_header
      %s17 = sphi 0, %s21
      %p18 = scmp.ge.s32.totalorder %s17, 5
      %s27 = sphi 0, %s29
      %s30 = sphi 0, %s27
      %s31 = sphi 0, %s30
      %s47 = sphi 0, %s31
      %s51 = sphi 0, %s51
      %s53 = sphi 0, %s51
      %s54 = sphi 0, %s53
      %s68 = sphi 0, %s54
      %s72 = sphi 0, %s72
      %s74 = sphi 0, %s72
      %s75 = sphi 0, %s74
      %s89 = sphi 0, %s75
      %s93 = sphi 0, %s93
      %s95 = sphi 0, %s93
      %s96 = sphi 0, %s95
      %s110 = sphi 0, %s96
      %s116 = sphi 0, %s118
      %s119 = sphi 0, %s116
      %s120 = sphi 0, %s119
      %s136 = sphi 0, %s120
    $region4: #{tpu_custom_call.1} parent=1 // loop_header_branch
      %20 = sbr.rel (%p18) target = $region8
    $region5: #{tpu_custom_call.1} parent=1 // loop_body
      %s22 = ssub.s32 %s17, 1
      %s23 = ssub.s32 %s17, 2
      %s24 = sadd.s32 %s17, 1
      %s25 = ssub.s32 %s17, %s24
      %p26 = scmp.eq.s32.totalorder %s25, 0
      %s28 = sadd.s32 %s27, 1
      %s29 = scalar_select %p26, %s27, %s28
      %p32 = pneg %p26
      %p33 = scmp.eq.s32.totalorder %s17, 2
      %p34 = por %p32, %p33
      %p35 = scmp.ne.s32.totalorder %s27, %s30
      %p36 = scmp.eq.s32.totalorder %s17, 0
      %p37 = por %p35, %p36
      %p38 = scmp.ne.s32.totalorder %s27, %s30
      %p39 = scmp.eq.s32.totalorder %s22, 2
      %p40 = por %p38, %p39
      %p41 = scmp.ne.s32.totalorder %s30, %s31
      %p42 = scmp.eq.s32.totalorder %s22, 0
      %p43 = por %p41, %p42
      %p44 = scmp.ne.s32.totalorder %s30, %s31
      %p45 = scmp.eq.s32.totalorder %s23, 2
      %p46 = por %p44, %p45
      %p48 = scmp.ne.s32.totalorder %s31, %s47
      %p49 = scmp.eq.s32.totalorder %s23, 0
      %p50 = por %p48, %p49
      %s52 = sadd.s32 %s51, 1
      %p55 = scmp.eq.s32.totalorder %s17, 2
      %p56 = scmp.ne.s32.totalorder %s51, %s53
      %p57 = scmp.eq.s32.totalorder %s17, 0
      %p58 = por %p56, %p57
      %p59 = scmp.ne.s32.totalorder %s51, %s53
      %p60 = scmp.eq.s32.totalorder %s22, 2
      %p61 = por %p59, %p60
      %p62 = scmp.ne.s32.totalorder %s53, %s54
      %p63 = scmp.eq.s32.totalorder %s22, 0
      %p64 = por %p62, %p63
      %p65 = scmp.ne.s32.totalorder %s53, %s54
      %p66 = scmp.eq.s32.totalorder %s23, 2
      %p67 = por %p65, %p66
      %p69 = scmp.ne.s32.totalorder %s54, %s68
      %p70 = scmp.eq.s32.totalorder %s23, 0
      %p71 = por %p69, %p70
      %s73 = sadd.s32 %s72, 1
      %p76 = scmp.eq.s32.totalorder %s17, 2
      %p77 = scmp.ne.s32.totalorder %s72, %s74
      %p78 = scmp.eq.s32.totalorder %s17, 0
      %p79 = por %p77, %p78
      %p80 = scmp.ne.s32.totalorder %s72, %s74
      %p81 = scmp.eq.s32.totalorder %s22, 2
      %p82 = por %p80, %p81
      %p83 = scmp.ne.s32.totalorder %s74, %s75
      %p84 = scmp.eq.s32.totalorder %s22, 0
      %p85 = por %p83, %p84
      %p86 = scmp.ne.s32.totalorder %s74, %s75
      %p87 = scmp.eq.s32.totalorder %s23, 2
      %p88 = por %p86, %p87
      %p90 = scmp.ne.s32.totalorder %s75, %s89
      %p91 = scmp.eq.s32.totalorder %s23, 0
      %p92 = por %p90, %p91
      %s94 = sadd.s32 %s93, 1
      %p97 = scmp.eq.s32.totalorder %s17, 2
      %p98 = scmp.ne.s32.totalorder %s93, %s95
      %p99 = scmp.eq.s32.totalorder %s17, 0
      %p100 = por %p98, %p99
      %p101 = scmp.ne.s32.totalorder %s93, %s95
      %p102 = scmp.eq.s32.totalorder %s22, 2
      %p103 = por %p101, %p102
      %p104 = scmp.ne.s32.totalorder %s95, %s96
      %p105 = scmp.eq.s32.totalorder %s22, 0
      %p106 = por %p104, %p105
      %p107 = scmp.ne.s32.totalorder %s95, %s96
      %p108 = scmp.eq.s32.totalorder %s23, 2
      %p109 = por %p107, %p108
      %p111 = scmp.ne.s32.totalorder %s96, %s110
      %p112 = scmp.eq.s32.totalorder %s23, 0
      %p113 = por %p111, %p112
      %s114 = ssub.s32 %s17, %s24
      %p115 = scmp.eq.s32.totalorder %s114, 0
      %s117 = sadd.s32 %s116, 1
      %s118 = scalar_select %p115, %s116, %s117
      %p121 = pneg %p115
      %p122 = scmp.eq.s32.totalorder %s17, 2
      %p123 = por %p121, %p122
      %p124 = scmp.ne.s32.totalorder %s116, %s119
      %p125 = scmp.eq.s32.totalorder %s17, 0
      %p126 = por %p124, %p125
      %p127 = scmp.ne.s32.totalorder %s116, %s119
      %p128 = scmp.eq.s32.totalorder %s22, 2
      %p129 = por %p127, %p128
      %p130 = scmp.ne.s32.totalorder %s119, %s120
      %p131 = scmp.eq.s32.totalorder %s22, 0
      %p132 = por %p130, %p131
      %p133 = scmp.ne.s32.totalorder %s119, %s120
      %p134 = scmp.eq.s32.totalorder %s23, 2
      %p135 = por %p133, %p134
      %p137 = scmp.ne.s32.totalorder %s120, %s136
      %p138 = scmp.eq.s32.totalorder %s23, 0
      %p139 = por %p137, %p138
      %p140 = scmp.le.s32.totalorder 1, %s17
      %p141 = scmp.lt.s32.totalorder %s17, 4
      %p142 = pnand %p140, %p141
      %p143 = pneg %p142
      // Predicated region
      $region9: #{tpu_custom_call.1} parent=5 // pred_check
        _
      $region10: #{tpu_custom_call.1} parent=5 // pred_check_branch
        %145 = sbr.rel (%p142) target = $region12
      $region11: #{tpu_custom_call.1} parent=5 // pred_region
        %s146 = ssub.s32 %s17, 1
        // Predicated region
        $region13: #{tpu_custom_call.1} parent=11 // pred_check
          %p147 = pneg %p64
        $region14: #{tpu_custom_call.1} parent=11 // pred_check_branch
          %149 = sbr.rel (%p147) target = $region16
        $region15: #{tpu_custom_call.1} parent=11 // pred_region
          %s151 = ssub.s32 2048, 2048
          %152 = vsyncadd [#allocation6], %s151
          %s153 = sshll.u32 [#allocation5], 4
          %s154 = int_to_ptr.vmem [resolvable:$true] %s153
          %159 = dma.hbm_to_vmem [thread:$0]  %s1, 2048, %s154, [#allocation6], 128, 128, 8
        $region16: #{tpu_custom_call.1} parent=11 // pred_fallthru
          _
        // Predicated region
        $region17: #{tpu_custom_call.1} parent=11 // pred_check
          %p160 = pneg %p85
        $region18: #{tpu_custom_call.1} parent=11 // pred_check_branch
          %162 = sbr.rel (%p160) target = $region20
        $region19: #{tpu_custom_call.1} parent=11 // pred_region
          _
        $region20: #{tpu_custom_call.1} parent=11 // pred_fallthru
          _
        // Predicated region
        $region21: #{tpu_custom_call.1} parent=11 // pred_check
          %p163 = pneg %p106
        $region22: #{tpu_custom_call.1} parent=11 // pred_check_branch
          %165 = sbr.rel (%p163) target = $region24
        $region23: #{tpu_custom_call.1} parent=11 // pred_region
          %s167 = ssub.s32 2048, 2048
          %168 = vsyncadd [#allocation6], %s167
          %s169 = sshll.u32 [#allocation7], 4
          %s170 = int_to_ptr.vmem [resolvable:$true] %s169
          %175 = dma.hbm_to_vmem [thread:$0]  %s3, 2048, %s170, [#allocation6], 128, 128, 8
        $region24: #{tpu_custom_call.1} parent=11 // pred_fallthru
          _
      $region12: #{tpu_custom_call.1} parent=5 // pred_fallthru
        _
      %p176 = scmp.lt.s32.totalorder %s17, 3
      // Predicated region
      $region25: #{tpu_custom_call.1} parent=5 // pred_check
        %p177 = pneg %p176
      $region26: #{tpu_custom_call.1} parent=5 // pred_check_branch
        %179 = sbr.rel (%p177) target = $region28
      $region27: #{tpu_custom_call.1} parent=5 // pred_region
        // Predicated region
        $region29: #{tpu_custom_call.1} parent=27 // pred_check
          %p180 = pneg %p37
        $region30: #{tpu_custom_call.1} parent=27 // pred_check_branch
          %182 = sbr.rel (%p180) target = $region32
        $region31: #{tpu_custom_call.1} parent=27 // pred_region
          %s183 = sand.u32 %s27, 1
          %s184 = scalar_lea.sflag [#allocation3], %s183
          %s185 = sand.u32 %s27, 1
          %s186 = smul.addr %s185, 8
          %s187 = scalar_lea.vmem [#allocation2], %s186
          %s189 = ssub.s32 128, 128
          %190 = vsyncadd %s184, %s189
          %s191 = smul.addr %s17, 128
          %s192 = scalar_lea.hbm %s0, %s191
          %s194 = sshll.u32 %s187, 4
          %s195 = int_to_ptr.vmem [resolvable:$true] %s194
          %197 = dma.hbm_to_vmem [thread:$0]  %s192, 128, %s195, %s184
        $region32: #{tpu_custom_call.1} parent=27 // pred_fallthru
          _
      $region28: #{tpu_custom_call.1} parent=5 // pred_fallthru
        _
      %p198 = scmp.le.s32.totalorder 1, %s17
      %p199 = scmp.lt.s32.totalorder %s17, 4
      %p200 = pnand %p198, %p199
      %p201 = pneg %p200
      // Predicated region
      $region33: #{tpu_custom_call.1} parent=5 // pred_check
        _
      $region34: #{tpu_custom_call.1} parent=5 // pred_check_branch
        %203 = sbr.rel (%p200) target = $region36
      $region35: #{tpu_custom_call.1} parent=5 // pred_region
        %s204 = ssub.s32 %s17, 1
        %s205 = sand.u32 %s30, 1
        %s206 = scalar_lea.sflag [#allocation3], %s205
        %s207 = sand.u32 %s30, 1
        %s208 = smul.addr %s207, 8
        %s209 = scalar_lea.vmem [#allocation2], %s208
        // Predicated region
        $region37: #{tpu_custom_call.1} parent=35 // pred_check
          %p210 = pneg %p43
        $region38: #{tpu_custom_call.1} parent=35 // pred_check_branch
          %212 = sbr.rel (%p210) target = $region40
        $region39: #{tpu_custom_call.1} parent=35 // pred_region
          %213 = dma.done %s206, 128
        $region40: #{tpu_custom_call.1} parent=35 // pred_fallthru
          _
        // Predicated region
        $region41: #{tpu_custom_call.1} parent=35 // pred_check
          %p214 = pneg %p64
        $region42: #{tpu_custom_call.1} parent=35 // pred_check_branch
          %216 = sbr.rel (%p214) target = $region44
        $region43: #{tpu_custom_call.1} parent=35 // pred_region
          %217 = dma.done [#allocation6], 2048
        $region44: #{tpu_custom_call.1} parent=35 // pred_fallthru
          _
        // Predicated region
        $region45: #{tpu_custom_call.1} parent=35 // pred_check
          %p218 = pneg %p106
        $region46: #{tpu_custom_call.1} parent=35 // pred_check_branch
          %220 = sbr.rel (%p218) target = $region48
        $region47: #{tpu_custom_call.1} parent=35 // pred_region
          %221 = dma.done [#allocation6], 2048
        $region48: #{tpu_custom_call.1} parent=35 // pred_fallthru
          _
        %s222 = sand.u32 %s30, 1
        %s223 = scalar_lea.sflag [#allocation3], %s222
        %s224 = sand.u32 %s30, 1
        %s225 = smul.addr %s224, 8
        %s226 = scalar_lea.vmem [#allocation2], %s225
        %p227 = pneg %p43
        %p228 = pneg %p40
        %p229 = pneg %p64
        %p230 = pneg %p61
        %p231 = pneg %p85
        %p232 = pneg %p82
        %p233 = pneg %p106
        %p234 = pneg %p103
        %p235 = pneg %p132
        %p236 = pneg %p129
        %s237 = sand.u32 %s119, 1
        %s238 = scalar_lea.sflag [#allocation4], %s237
        %s239 = sand.u32 %s119, 1
        %s240 = smul.addr %s239, 8
        %s241 = scalar_lea.vmem [#allocation8], %s240
        %v242 = vld [vmem:[%s209] sm:$0xff]
        %v243 = vld [vmem:[#allocation5] sm:$0xff]
        %v244 = vld [vmem:[#allocation5 + $0x8] sm:$0xff]
        %v245 = vld [vmem:[#allocation5 + $0x10] sm:$0xff]
        %v246 = vld [vmem:[#allocation5 + $0x18] sm:$0xff]
        %v247 = vld [vmem:[#allocation5 + $0x20] sm:$0xff]
        %v248 = vld [vmem:[#allocation5 + $0x28] sm:$0xff]
        %v249 = vld [vmem:[#allocation5 + $0x30] sm:$0xff]
        %v250 = vld [vmem:[#allocation5 + $0x38] sm:$0xff]
        %v251 = vld [vmem:[#allocation5 + $0x40] sm:$0xff]
        %v252 = vld [vmem:[#allocation5 + $0x48] sm:$0xff]
        %v253 = vld [vmem:[#allocation5 + $0x50] sm:$0xff]
        %v254 = vld [vmem:[#allocation5 + $0x58] sm:$0xff]
        %v255 = vld [vmem:[#allocation5 + $0x60] sm:$0xff]
        %v256 = vld [vmem:[#allocation5 + $0x68] sm:$0xff]
        %v257 = vld [vmem:[#allocation5 + $0x70] sm:$0xff]
        %v258 = vld [vmem:[#allocation5 + $0x78] sm:$0xff]
        %v259 = vld [vmem:[%s2] sm:$0x1]
        %v261 = vlaneseq
        %v262 = vshrl.u32 %v261, 7
        %v263 = vsub.s32 0, %v262
        %v264 = vrot.slane %v259, %v263
        %266 = vmatprep.subr.mxu0 0.0
        %267 = vmatpush1.msra.mxu0 %v243
        %268 = vmatprep.subr.mxu0 0.0
        %269 = vmatpush1.msra.mxu0 %v244
        %270 = vmatprep.subr.mxu0 0.0
        %271 = vmatpush1.msra.mxu0 %v245
        %272 = vmatprep.subr.mxu0 0.0
        %273 = vmatpush1.msra.mxu0 %v246
        %274 = vmatprep.subr.mxu0 0.0
        %275 = vmatpush1.msra.mxu0 %v247
        %276 = vmatprep.subr.mxu0 0.0
        %277 = vmatpush1.msra.mxu0 %v248
        %278 = vmatprep.subr.mxu0 0.0
        %279 = vmatpush1.msra.mxu0 %v249
        %280 = vmatprep.subr.mxu0 0.0
        %281 = vmatpush1.msra.mxu0 %v250
        %282 = vmatprep.subr.mxu0 0.0
        %283 = vmatpush1.msra.mxu0 %v251
        %284 = vmatprep.subr.mxu0 0.0
        %285 = vmatpush1.msra.mxu0 %v252
        %286 = vmatprep.subr.mxu0 0.0
        %287 = vmatpush1.msra.mxu0 %v253
        %288 = vmatprep.subr.mxu0 0.0
        %289 = vmatpush1.msra.mxu0 %v254
        %290 = vmatprep.subr.mxu0 0.0
        %291 = vmatpush1.msra.mxu0 %v255
        %292 = vmatprep.subr.mxu0 0.0
        %293 = vmatpush1.msra.mxu0 %v256
        %294 = vmatprep.subr.mxu0 0.0
        %295 = vmatpush1.msra.mxu0 %v257
        %296 = vmatprep.subr.mxu0 0.0
        %297 = vmatpush1.msra.mxu0 %v258
        %298 = vmatprep.subr.mxu0 0.0
        %299 = vmatpush1.msra.mxu0 0.0
        %300 = vmatprep.subr.mxu0 0.0
        %301 = vmatpush1.msra.mxu0 0.0
        %302 = vmatprep.subr.mxu0 0.0
        %303 = vmatpush1.msra.mxu0 0.0
        %304 = vmatprep.subr.mxu0 0.0
        %305 = vmatpush1.msra.mxu0 0.0
        %306 = vmatprep.subr.mxu0 0.0
        %307 = vmatpush1.msra.mxu0 0.0
        %308 = vmatprep.subr.mxu0 0.0
        %309 = vmatpush1.msra.mxu0 0.0
        %310 = vmatprep.subr.mxu0 0.0
        %311 = vmatpush1.msra.mxu0 0.0
        %312 = vmatprep.subr.mxu0 0.0
        %313 = vmatpush1.msra.mxu0 0.0
        %314 = vmatprep.subr.mxu0 0.0
        %315 = vmatpush1.msra.mxu0 0.0
        %316 = vmatprep.subr.mxu0 0.0
        %317 = vmatpush1.msra.mxu0 0.0
        %318 = vmatprep.subr.mxu0 0.0
        %319 = vmatpush1.msra.mxu0 0.0
        %320 = vmatprep.subr.mxu0 0.0
        %321 = vmatpush1.msra.mxu0 0.0
        %322 = vmatprep.subr.mxu0 0.0
        %323 = vmatpush1.msra.mxu0 0.0
        %324 = vmatprep.subr.mxu0 0.0
        %325 = vmatpush1.msra.mxu0 0.0
        %326 = vmatprep.subr.mxu0 0.0
        %327 = vmatpush1.msra.mxu0 0.0
        %328 = vmatprep.subr.mxu0 0.0
        %329 = vmatpush1.msra.mxu0 0.0
        %330 = vmatprep.mubr.f32.mxu0 0.0
        %331 = vmatmul.mubr.f32.gmra.mrb[0].mxu0 %v242
        %v332 = vpop.f32.mrb[0].mxu0
        %v333 = vadd.f32 %v264, %v332
        %v334 = vpop.f32.mrb[0].mxu0
        %335 = vdwg.mxu0
        %v336 = vmax.f32 %v333, 0.0
        %v337 = vmul.f32 %v336, %v336
        %338 = vadd.xlane.f32.xlu0 %v337
        %v339 = vpop.xlane.xlu0 %338
        %v340 = vmax.f32 %v339, 1e-24
        %v341 = vrsqrt.pop %v340
        %v342 = vmul.f32 %v341, 20.0
        %v343 = vmul.f32 %v336, %v342
        %v344 = vld [vmem:[#allocation7] sm:$0xff]
        %v345 = vld [vmem:[#allocation7 + $0x8] sm:$0xff]
        %v346 = vld [vmem:[#allocation7 + $0x10] sm:$0xff]
        %v347 = vld [vmem:[#allocation7 + $0x18] sm:$0xff]
        %v348 = vld [vmem:[#allocation7 + $0x20] sm:$0xff]
        %v349 = vld [vmem:[#allocation7 + $0x28] sm:$0xff]
        %v350 = vld [vmem:[#allocation7 + $0x30] sm:$0xff]
        %v351 = vld [vmem:[#allocation7 + $0x38] sm:$0xff]
        %v352 = vld [vmem:[#allocation7 + $0x40] sm:$0xff]
        %v353 = vld [vmem:[#allocation7 + $0x48] sm:$0xff]
        %v354 = vld [vmem:[#allocation7 + $0x50] sm:$0xff]
        %v355 = vld [vmem:[#allocation7 + $0x58] sm:$0xff]
        %v356 = vld [vmem:[#allocation7 + $0x60] sm:$0xff]
        %v357 = vld [vmem:[#allocation7 + $0x68] sm:$0xff]
        %v358 = vld [vmem:[#allocation7 + $0x70] sm:$0xff]
        %v359 = vld [vmem:[#allocation7 + $0x78] sm:$0xff]
        %360 = vmatprep.subr.mxu0 0.0
        %361 = vmatpush1.msra.mxu0 %v344
        %362 = vmatprep.subr.mxu0 0.0
        %363 = vmatpush1.msra.mxu0 %v345
        %364 = vmatprep.subr.mxu0 0.0
        %365 = vmatpush1.msra.mxu0 %v346
        %366 = vmatprep.subr.mxu0 0.0
        %367 = vmatpush1.msra.mxu0 %v347
        %368 = vmatprep.subr.mxu0 0.0
        %369 = vmatpush1.msra.mxu0 %v348
        %370 = vmatprep.subr.mxu0 0.0
        %371 = vmatpush1.msra.mxu0 %v349
        %372 = vmatprep.subr.mxu0 0.0
        %373 = vmatpush1.msra.mxu0 %v350
        %374 = vmatprep.subr.mxu0 0.0
        %375 = vmatpush1.msra.mxu0 %v351
        %376 = vmatprep.subr.mxu0 0.0
        %377 = vmatpush1.msra.mxu0 %v352
        %378 = vmatprep.subr.mxu0 0.0
        %379 = vmatpush1.msra.mxu0 %v353
        %380 = vmatprep.subr.mxu0 0.0
        %381 = vmatpush1.msra.mxu0 %v354
        %382 = vmatprep.subr.mxu0 0.0
        %383 = vmatpush1.msra.mxu0 %v355
        %384 = vmatprep.subr.mxu0 0.0
        %385 = vmatpush1.msra.mxu0 %v356
        %386 = vmatprep.subr.mxu0 0.0
        %387 = vmatpush1.msra.mxu0 %v357
        %388 = vmatprep.subr.mxu0 0.0
        %389 = vmatpush1.msra.mxu0 %v358
        %390 = vmatprep.subr.mxu0 0.0
        %391 = vmatpush1.msra.mxu0 %v359
        %392 = vmatprep.subr.mxu0 0.0
        %393 = vmatpush1.msra.mxu0 0.0
        %394 = vmatprep.subr.mxu0 0.0
        %395 = vmatpush1.msra.mxu0 0.0
        %396 = vmatprep.subr.mxu0 0.0
        %397 = vmatpush1.msra.mxu0 0.0
        %398 = vmatprep.subr.mxu0 0.0
        %399 = vmatpush1.msra.mxu0 0.0
        %400 = vmatprep.subr.mxu0 0.0
        %401 = vmatpush1.msra.mxu0 0.0
        %402 = vmatprep.subr.mxu0 0.0
        %403 = vmatpush1.msra.mxu0 0.0
        %404 = vmatprep.subr.mxu0 0.0
        %405 = vmatpush1.msra.mxu0 0.0
        %406 = vmatprep.subr.mxu0 0.0
        %407 = vmatpush1.msra.mxu0 0.0
        %408 = vmatprep.subr.mxu0 0.0
        %409 = vmatpush1.msra.mxu0 0.0
        %410 = vmatprep.subr.mxu0 0.0
        %411 = vmatpush1.msra.mxu0 0.0
        %412 = vmatprep.subr.mxu0 0.0
        %413 = vmatpush1.msra.mxu0 0.0
        %414 = vmatprep.subr.mxu0 0.0
        %415 = vmatpush1.msra.mxu0 0.0
        %416 = vmatprep.subr.mxu0 0.0
        %417 = vmatpush1.msra.mxu0 0.0
        %418 = vmatprep.subr.mxu0 0.0
        %419 = vmatpush1.msra.mxu0 0.0
        %420 = vmatprep.subr.mxu0 0.0
        %421 = vmatpush1.msra.mxu0 0.0
        %422 = vmatprep.subr.mxu0 0.0
        %423 = vmatpush1.msra.mxu0 0.0
        %424 = vmatprep.mubr.f32.mxu0 0.0
        %425 = vmatmul.mubr.f32.gmra.mrb[0].mxu0 %v343
        %v426 = vpop.f32.mrb[0].mxu0
        %v427 = vadd.f32 0.0, %v426
        %v428 = vpop.f32.mrb[0].mxu0
        %429 = vdwg.mxu0
        %430 = vst [vmem:[%s241] sm:$0xff] %v427
        %s431 = sand.u32 %s119, 1
        %s432 = scalar_lea.sflag [#allocation4], %s431
        %s433 = sand.u32 %s119, 1
        %s434 = smul.addr %s433, 8
        %s435 = scalar_lea.vmem [#allocation8], %s434
        // Predicated region
        $region49: #{tpu_custom_call.1} parent=35 // pred_check
          %p436 = pneg %p129
        $region50: #{tpu_custom_call.1} parent=35 // pred_check_branch
          %438 = sbr.rel (%p436) target = $region52
        $region51: #{tpu_custom_call.1} parent=35 // pred_region
          %s440 = ssub.s32 128, 128
          %441 = vsyncadd %s432, %s440
          %s442 = smul.addr %s22, 128
          %s443 = scalar_lea.hbm %s4, %s442
          %s445 = sshll.u32 %s435, 4
          %s446 = int_to_ptr.vmem [resolvable:$true] %s445
          %448 = dma.vmem_to_hbm [thread:$0]  %s446, 128, %s443, %s432
        $region52: #{tpu_custom_call.1} parent=35 // pred_fallthru
          _
      $region36: #{tpu_custom_call.1} parent=5 // pred_fallthru
        _
      %p449 = scmp.le.s32.totalorder 2, %s17
      // Predicated region
      $region53: #{tpu_custom_call.1} parent=5 // pred_check
        %p450 = pneg %p449
      $region54: #{tpu_custom_call.1} parent=5 // pred_check_branch
        %452 = sbr.rel (%p450) target = $region56
      $region55: #{tpu_custom_call.1} parent=5 // pred_region
        %s453 = ssub.s32 %s17, 2
        // Predicated region
        $region57: #{tpu_custom_call.1} parent=55 // pred_check
          %p454 = pneg %p135
        $region58: #{tpu_custom_call.1} parent=55 // pred_check_branch
          %456 = sbr.rel (%p454) target = $region60
        $region59: #{tpu_custom_call.1} parent=55 // pred_region
          %s457 = sand.u32 %s120, 1
          %s458 = scalar_lea.sflag [#allocation4], %s457
          %s459 = sand.u32 %s120, 1
          %s460 = smul.addr %s459, 8
          %s461 = scalar_lea.vmem [#allocation8], %s460
          %462 = dma.done %s458, 128
        $region60: #{tpu_custom_call.1} parent=55 // pred_fallthru
          _
      $region56: #{tpu_custom_call.1} parent=5 // pred_fallthru
        _
    $region6: #{tpu_custom_call.1} parent=1 // loop_footer
      %s21 = sadd.s32 1, %s17
    $region7: #{tpu_custom_call.1} parent=1 // loop_footer_branch
      %16 = sbr.rel target = $region3
    $region8: #{tpu_custom_call.1} parent=1 // loop_exit
      _
    %463 = vsyncpa [#allocation3], 1
    %s464 = scalar_lea.sflag [#allocation3], 1
    %465 = vsyncpa %s464, 1
    %466 = vsyncpa [#allocation6], 1
    %467 = vsyncpa [#allocation4], 1
    %s468 = scalar_lea.sflag [#allocation4], 1
    %469 = vsyncpa %s468, 1

</llo_original>
